<compile_context>
chip_gen: v7x
topology: tpu7x:2x2x1
jax: 0.10.0
libtpu: 0.0.40
codegen_flags: <defaults>
</compile_context>

<pallas_src>
import functools

import jax
import jax.numpy as jnp
from jax.experimental import pallas as pl
from jax.experimental.pallas import tpu as pltpu

_LANE = 128      # lane width of a vreg (last dim)
_SUBLANE = 8     # sublane count of a vreg (second-to-last dim)


def _round_up(n, m):
    return ((n + m - 1) // m) * m


def _cdiv(a, b):
    return -(-a // b)


# --------------------------------------------------------------------------
# Hardware capability queries (trace-time, cached)
# --------------------------------------------------------------------------

def _device_kind() -> str:
    try:
        return jax.devices()[0].device_kind.lower()
    except Exception:
        return ""


@functools.lru_cache(maxsize=None)
def _is_pre_v6() -> bool:
    """True on v5e and older (no bf16 VPU / bf16 EUP fast path)."""
    kind = _device_kind()
    return any(tag in kind for tag in ("v2", "v3", "v4", "v5"))


def _elementwise_dtype():
    # v6e/v7x: do bias-add / ReLU on the hidden activations in bf16 (they get
    # bf16-quantized for the next MXU pass anyway -> halves vreg pressure and
    # VPU work).  v5e keeps the f32 elementwise path.
    return jnp.float32 if _is_pre_v6() else jnp.bfloat16


@functools.lru_cache(maxsize=None)
def _vmem_budget_bytes() -> int:
    """Generation-aware VMEM budget (physical capacity minus headroom)."""
    try:
        cap = int(pltpu.get_tpu_info().vmem_capacity_bytes)
    except Exception:
        cap = (64 << 20) if "7" in _device_kind() else (128 << 20)
    if cap <= (64 << 20):
        # v7x: 64 MiB physical per TensorCore -> leave headroom for internal
        # scratch / spills.
        budget = min(cap - (12 << 20), 52 << 20)
    else:
        # v5e / v6e: 128 MiB physical.
        budget = min(cap - (28 << 20), 100 << 20)
    return max(budget, 32 << 20)


@functools.lru_cache(maxsize=None)
def _buffered_consts_supported() -> bool:
    """One-time static capability probe: can constant blocks be single-buffered
    via pipeline_mode=pl.Buffered(1)?  Compiles one tiny probe kernel; never
    masks errors of (or re-traces) the real MLP kernel."""
    if not hasattr(pl, "Buffered"):
        return False
    try:
        def _probe(c_ref, o_ref):
            o_ref[...] = c_ref[...] * 2.0

        fn = pl.pallas_call(
            _probe,
            out_shape=jax.ShapeDtypeStruct((16, 128), jnp.float32),
            grid_spec=pltpu.PrefetchScalarGridSpec(
                num_scalar_prefetch=0,
                grid=(2,),
                in_specs=[pl.BlockSpec((8, 128), lambda i: (0, 0),
                                       pipeline_mode=pl.Buffered(1))],
                out_specs=pl.BlockSpec((8, 128), lambda i: (i, 0)),
            ),
        )
        jax.jit(fn).lower(jax.ShapeDtypeStruct((8, 128), jnp.float32)).compile()
        return True
    except Exception:
        return False


# --------------------------------------------------------------------------
# Kernel
# --------------------------------------------------------------------------

def _mlp_kernel(x_ref, w1_ref, b1_ref, w2_ref, b2_ref, w3_ref, b3_ref, o_ref, *,
                softmax: bool, out_valid: int, compute_dtype, elem_dtype,
                approx_recip: bool):
    # Matmuls run on the MXU in `compute_dtype` (bf16) with f32 accumulation.
    x = x_ref[...].astype(compute_dtype)

    def bias_relu(acc_f32, b_ref):
        # Elementwise dtype is bf16 on v6e/v7x (bf16 VPU), f32 on v5e.
        h = acc_f32.astype(elem_dtype)
        h = jnp.maximum(h + b_ref[...], 0.0)
        return h.astype(compute_dtype)

    h = bias_relu(jnp.dot(x, w1_ref[...], preferred_element_type=jnp.float32), b1_ref)
    h = bias_relu(jnp.dot(h, w2_ref[...], preferred_element_type=jnp.float32), b2_ref)
    out = jnp.dot(h, w3_ref[...], preferred_element_type=jnp.float32) + b3_ref[...]

    if softmax:  # static Python flag -> matches torch.nn.Softmax(dim=-1)
        if out_valid < out.shape[-1]:
            # Mask zero-padded logit columns so they don't leak into the
            # softmax normalization (exp(-inf) == 0).
            col = jax.lax.broadcasted_iota(jnp.int32, out.shape, dimension=1)
            out = jnp.where(col < out_valid, out, -jnp.inf)
        m = jnp.max(out, axis=-1, keepdims=True)
        e = jnp.exp(out - m)
        s = jnp.sum(e, axis=-1, keepdims=True)
        if approx_recip:
            # EUP reciprocal sits in its own VLIW slot; one Newton-Raphson step
            # recovers ~1e-7 accuracy (row sums stay ~1).
            r = pl.reciprocal(s, approx=True)
            r = r * (2.0 - s * r)
        else:
            r = pl.reciprocal(s, approx=False)
        out = e * r

    o_ref[...] = out.astype(o_ref.dtype)   # lane-dense (128-multiple) store


def _build_mlp_call(*, B_p, in_p, hid_p, out_p, out_dim, block_b, softmax,
                    compute_dtype, elem_dtype, out_dtype, approx_recip,
                    vmem_limit, buffered_consts):
    grid = (B_p // block_b,)

    def const_spec(shape):
        idx = lambda i: (0,) * len(shape)
        if buffered_consts:
            # Constant (replicated) blocks never change across grid steps:
            # single-buffer them to halve their VMEM footprint.
            return pl.BlockSpec(shape, idx, pipeline_mode=pl.Buffered(1))
        return pl.BlockSpec(shape, idx)

    kernel = functools.partial(
        _mlp_kernel, softmax=softmax, out_valid=out_dim,
        compute_dtype=compute_dtype, elem_dtype=elem_dtype,
        approx_recip=approx_recip)

    return pl.pallas_call(
        kernel,
        out_shape=jax.ShapeDtypeStruct((B_p, out_p), out_dtype),
        grid_spec=pltpu.PrefetchScalarGridSpec(
            num_scalar_prefetch=0,
            grid=grid,
            in_specs=[
                pl.BlockSpec((block_b, in_p), lambda i: (i, 0)),  # x tile (f32)
                const_spec((in_p, hid_p)),    # w1 (bf16, padded)
                const_spec((1, hid_p)),       # b1 (elementwise dtype)
                const_spec((hid_p, hid_p)),   # w2
                const_spec((1, hid_p)),       # b2
                const_spec((hid_p, out_p)),   # w3
                const_spec((1, out_p)),       # b3 (f32)
            ],
            out_specs=pl.BlockSpec((block_b, out_p), lambda i: (i, 0)),
        ),
        compiler_params=pltpu.CompilerParams(
            dimension_semantics=("parallel",),   # batch axis -> v7x megacore
            vmem_limit_bytes=int(vmem_limit),
        ),
    )


# --------------------------------------------------------------------------
# Wrapper
# --------------------------------------------------------------------------

def mlp_forward(x, params, *, softmax: bool, block_b: int | None = None,
                compute_dtype=jnp.bfloat16, elementwise_dtype=None,
                out_dtype=jnp.float32):
    """Run the fused MLP kernel.

    x:       [B, input_size] float32
    params:  dict with w1 [in,hid], b1 [1,hid], w2 [hid,hid], b2 [1,hid],
             w3 [hid,out], b3 [1,out]  (weights stored [in, out])
    out_dtype can be set to bf16 by callers that tolerate it (halves output DMA).
    """
    if elementwise_dtype is None:
        elementwise_dtype = _elementwise_dtype()
    approx_recip = not _is_pre_v6()

    w1, b1, w2, b2, w3, b3 = (params[k] for k in ("w1", "b1", "w2", "b2", "w3", "b3"))
    B, in_dim = x.shape
    hid = w1.shape[1]
    out_dim = w3.shape[1]

    # Pad all feature dims to 128-lane multiples (lane-dense operands + output).
    in_p = _round_up(in_dim, _LANE)
    hid_p = _round_up(hid, _LANE)
    out_p = _round_up(out_dim, _LANE)

    w_item = jnp.dtype(compute_dtype).itemsize
    e_item = jnp.dtype(elementwise_dtype).itemsize
    o_item = jnp.dtype(out_dtype).itemsize

    buffered = _buffered_consts_supported()
    wbufs = 1 if buffered else 2
    budget = _vmem_budget_bytes()

    weight_bytes = wbufs * ((in_p * hid_p + hid_p * hid_p + hid_p * out_p) * w_item
                            + 2 * hid_p * e_item + out_p * 4)

    # TODO(synk): when resident bf16 weights (w2 alone is hid_p*hid_p*2B) exceed
    # the VMEM budget (esp. v7x, 64 MiB/TC), switch fc2/fc3 to a K-tiled grid
    # axis with a VMEM accumulator (or stream weight slabs with
    # pltpu.emit_pipeline) instead of replicating the full matrices.

    # Batch tile: multiple of 8 sublanes, derived from the VMEM budget (bigger
    # tiles amortize the ~0.35 us/step pipeline overhead and give larger DMAs),
    # and split so that B >= 16 always yields >= 2 grid steps (v7x megacore).
    if block_b is None:
        per_row = (2 * in_p * 4                       # double-buffered f32 x tile
                   + 2 * out_p * o_item               # double-buffered out tile
                   + 2 * hid_p * (e_item + w_item))   # live hidden h + bf16 re-cast
        cap = max(budget - weight_bytes, 4 << 20) // per_row
        cap = max(_SUBLANE, (min(int(cap), 1024) // _SUBLANE) * _SUBLANE)
        if B >= 2 * _SUBLANE:
            half = _round_up(_cdiv(_round_up(B, _SUBLANE), 2), _SUBLANE)
            block_b = min(cap, half)
        else:
            block_b = min(cap, _round_up(B, _SUBLANE))
    block_b = max(_SUBLANE, _round_up(block_b, _SUBLANE))
    B_p = _round_up(B, block_b)

    # VMEM limit: real footprint + 25% margin, floored at 32 MiB, capped at the
    # generation-aware budget.
    vmem_est = (weight_bytes
                + 2 * block_b * in_p * 4
                + 2 * block_b * out_p * o_item
                + 2 * block_b * hid_p * (e_item + w_item))
    vmem_limit = int(min(budget, max(32 << 20, vmem_est + vmem_est // 4 + (2 << 20))))

    def pad2(a, rows, cols, dtype=None):
        if dtype is not None and a.dtype != dtype:
            a = a.astype(dtype)
        pr, pc = rows - a.shape[0], cols - a.shape[1]
        if pr or pc:
            a = jnp.pad(a, ((0, pr), (0, pc)))
        return a

    # x stays f32 (cast to bf16 inside the kernel); pad only if misaligned.
    x_p = pad2(x, B_p, in_p)
    w1_p = pad2(w1, in_p, hid_p, compute_dtype)
    w2_p = pad2(w2, hid_p, hid_p, compute_dtype)
    w3_p = pad2(w3, hid_p, out_p, compute_dtype)
    b1_p = pad2(b1, 1, hid_p, elementwise_dtype)
    b2_p = pad2(b2, 1, hid_p, elementwise_dtype)
    b3_p = pad2(b3, 1, out_p)                      # final bias stays f32

    out_padded = _build_mlp_call(
        B_p=B_p, in_p=in_p, hid_p=hid_p, out_p=out_p, out_dim=out_dim,
        block_b=block_b, softmax=softmax, compute_dtype=compute_dtype,
        elem_dtype=elementwise_dtype, out_dtype=out_dtype,
        approx_recip=approx_recip, vmem_limit=vmem_limit,
        buffered_consts=buffered,
    )(x_p, w1_p, b1_p, w2_p, b2_p, w3_p, b3_p)

    if B_p != B or out_p != out_dim:
        out_padded = out_padded[:B, :out_dim]
    return out_padded


# --------------------------------------------------------------------------
# Params / reference
# --------------------------------------------------------------------------

def init_mlp_params(key, input_size, hidden_size, output_size):
    """Deterministic init mimicking torch.nn.Linear's U(-1/sqrt(fan_in), 1/sqrt(fan_in))."""
    ks = jax.random.split(key, 6)

    def linear(kw, kb, fan_in, fan_out):
        bound = 1.0 / jnp.sqrt(jnp.float32(fan_in))
        # stored as [in, out] so the kernel computes x @ W (+ b)
        w = jax.random.uniform(kw, (fan_in, fan_out), jnp.float32, -bound, bound)
        b = jax.random.uniform(kb, (1, fan_out), jnp.float32, -bound, bound)
        return w, b

    w1, b1 = linear(ks[0], ks[1], input_size, hidden_size)
    w2, b2 = linear(ks[2], ks[3], hidden_size, hidden_size)
    w3, b3 = linear(ks[4], ks[5], hidden_size, output_size)
    return {"w1": w1, "b1": b1, "w2": w2, "b2": b2, "w3": w3, "b3": b3}


def _reference(x, p, softmax, *, compute_dtype=jnp.float32, elem_dtype=jnp.float32):
    """Pure-JAX reference with the same mixed precision as the kernel."""
    cd, ed = compute_dtype, elem_dtype

    def bias_relu(acc, b):
        h = jnp.maximum(acc.astype(ed) + b.astype(ed), 0.0)
        return h.astype(cd)

    h = bias_relu(jnp.dot(x.astype(cd), p["w1"].astype(cd),
                          preferred_element_type=jnp.float32), p["b1"])
    h = bias_relu(jnp.dot(h, p["w2"].astype(cd),
                          preferred_element_type=jnp.float32), p["b2"])
    o = jnp.dot(h, p["w3"].astype(cd),
                preferred_element_type=jnp.float32) + p["b3"]
    if softmax:
        o = jax.nn.softmax(o, axis=-1)
    return o


if __name__ == "__main__":
    key = jax.random.PRNGKey(0)
    k_param, k_x, k_x2 = jax.random.split(key, 3)

    batch, input_size, hidden_size, output_size = 8, 32, 64, 16
    params = init_mlp_params(k_param, input_size, hidden_size, output_size)
    x = jax.random.normal(k_x, (batch, input_size), jnp.float32)

    elem = _elementwise_dtype()

    # Both module variants (softmax=False / softmax=True).
    out_logits = jax.block_until_ready(mlp_forward(x, params, softmax=False))
    out_probs = jax.block_until_ready(mlp_forward(x, params, softmax=True))
    assert out_logits.shape == (batch, output_size)
    assert out_probs.shape == (batch, output_size)
    assert out_logits.dtype == jnp.float32

    # Tight check against a reference with the kernel's exact mixed precision.
    ref_logits = _reference(x, params, False, compute_dtype=jnp.bfloat16, elem_dtype=elem)
    ref_probs = _reference(x, params, True, compute_dtype=jnp.bfloat16, elem_dtype=elem)
    assert jnp.allclose(out_logits, ref_logits, atol=1e-4, rtol=1e-4)
    assert jnp.allclose(out_probs, ref_probs, atol=1e-4, rtol=1e-4)

    # Looser sanity check against full-f32 math (bf16 quantization error only).
    assert jnp.allclose(out_logits, _reference(x, params, False), atol=2e-2, rtol=2e-2)
    assert jnp.allclose(out_probs, _reference(x, params, True), atol=2e-2, rtol=2e-2)
    assert jnp.allclose(jnp.sum(out_probs, axis=-1), 1.0, atol=1e-3)

    # Second config: batch not a multiple of the tile -> exercises row padding,
    # the >=2-step grid, and the output slice path.
    batch2 = 37
    x2 = jax.random.normal(k_x2, (batch2, input_size), jnp.float32)
    out2 = jax.block_until_ready(mlp_forward(x2, params, softmax=True))
    ref2 = _reference(x2, params, True, compute_dtype=jnp.bfloat16, elem_dtype=elem)
    assert out2.shape == (batch2, output_size)
    assert jnp.allclose(out2, ref2, atol=1e-4, rtol=1e-4)
    assert jnp.allclose(jnp.sum(out2, axis=-1), 1.0, atol=1e-3)

    print("KERNEL_OK")
</pallas_src>

<mosaic_0001>
module attributes {stable_mosaic.version = 11 : i64} {
  func.func @_mlp_kernel(%arg0: i32, %arg1: memref<8x128xf32, #tpu.memory_space<vmem>>, %arg2: memref<128x128xbf16, #tpu.memory_space<vmem>>, %arg3: memref<1x128xbf16, #tpu.memory_space<vmem>>, %arg4: memref<128x128xbf16, #tpu.memory_space<vmem>>, %arg5: memref<1x128xbf16, #tpu.memory_space<vmem>>, %arg6: memref<128x128xbf16, #tpu.memory_space<vmem>>, %arg7: memref<1x128xf32, #tpu.memory_space<vmem>>, %arg8: memref<8x128xf32, #tpu.memory_space<vmem>>) attributes {dimension_semantics = [#tpu.dimension_semantics<parallel>], iteration_bounds = array<i64: 1>, scalar_prefetch = 0 : i64, scratch_operands = 0 : i64, tpu.core_type = #tpu.core_type<tc>, window_params = [{transform_indices = @transform_0, window_bounds = array<i64: 8, 128>}, {pipeline_mode = #tpu.pipeline_mode<synchronous>, transform_indices = @transform_1, window_bounds = array<i64: 128, 128>}, {pipeline_mode = #tpu.pipeline_mode<synchronous>, transform_indices = @transform_2, window_bounds = array<i64: 1, 128>}, {pipeline_mode = #tpu.pipeline_mode<synchronous>, transform_indices = @transform_3, window_bounds = array<i64: 128, 128>}, {pipeline_mode = #tpu.pipeline_mode<synchronous>, transform_indices = @transform_4, window_bounds = array<i64: 1, 128>}, {pipeline_mode = #tpu.pipeline_mode<synchronous>, transform_indices = @transform_5, window_bounds = array<i64: 128, 128>}, {pipeline_mode = #tpu.pipeline_mode<synchronous>, transform_indices = @transform_6, window_bounds = array<i64: 1, 128>}, {transform_indices = @transform_7, window_bounds = array<i64: 8, 128>}]} {
    %c0 = arith.constant 0 : index
    %c0_0 = arith.constant 0 : index
    %0 = vector.load %arg1[%c0, %c0_0] : memref<8x128xf32, #tpu.memory_space<vmem>>, vector<8x128xf32>
    %1 = arith.truncf %0 : vector<8x128xf32> to vector<8x128xbf16>
    %c0_1 = arith.constant 0 : index
    %c0_2 = arith.constant 0 : index
    %2 = vector.load %arg2[%c0_1, %c0_2] : memref<128x128xbf16, #tpu.memory_space<vmem>>, vector<128x128xbf16>
    %cst = arith.constant dense<0.000000e+00> : vector<8x128xf32>
    %3 = tpu.matmul %1, %2, %cst {dimension_numbers = #tpu.dot_dimension_numbers<[1], [0], [0], [1], [0, 0, 1, 1], [], []>} : vector<8x128xbf16>, vector<128x128xbf16>, vector<8x128xf32> -> vector<8x128xf32>
    %4 = arith.truncf %3 : vector<8x128xf32> to vector<8x128xbf16>
    %c0_3 = arith.constant 0 : index
    %c0_4 = arith.constant 0 : index
    %5 = vector.load %arg3[%c0_3, %c0_4] : memref<1x128xbf16, #tpu.memory_space<vmem>>, vector<1x128xbf16>
    %6 = vector.broadcast %5 : vector<1x128xbf16> to vector<8x128xbf16>
    %7 = arith.addf %4, %6 : vector<8x128xbf16>
    %cst_5 = arith.constant 0.000000e+00 : bf16
    %8 = vector.broadcast %cst_5 : bf16 to vector<8x128xbf16>
    %9 = arith.maximumf %7, %8 : vector<8x128xbf16>
    %c0_6 = arith.constant 0 : index
    %c0_7 = arith.constant 0 : index
    %10 = vector.load %arg4[%c0_6, %c0_7] : memref<128x128xbf16, #tpu.memory_space<vmem>>, vector<128x128xbf16>
    %cst_8 = arith.constant dense<0.000000e+00> : vector<8x128xf32>
    %11 = tpu.matmul %9, %10, %cst_8 {dimension_numbers = #tpu.dot_dimension_numbers<[1], [0], [0], [1], [0, 0, 1, 1], [], []>} : vector<8x128xbf16>, vector<128x128xbf16>, vector<8x128xf32> -> vector<8x128xf32>
    %12 = arith.truncf %11 : vector<8x128xf32> to vector<8x128xbf16>
    %c0_9 = arith.constant 0 : index
    %c0_10 = arith.constant 0 : index
    %13 = vector.load %arg5[%c0_9, %c0_10] : memref<1x128xbf16, #tpu.memory_space<vmem>>, vector<1x128xbf16>
    %14 = vector.broadcast %13 : vector<1x128xbf16> to vector<8x128xbf16>
    %15 = arith.addf %12, %14 : vector<8x128xbf16>
    %cst_11 = arith.constant 0.000000e+00 : bf16
    %16 = vector.broadcast %cst_11 : bf16 to vector<8x128xbf16>
    %17 = arith.maximumf %15, %16 : vector<8x128xbf16>
    %c0_12 = arith.constant 0 : index
    %c0_13 = arith.constant 0 : index
    %18 = vector.load %arg6[%c0_12, %c0_13] : memref<128x128xbf16, #tpu.memory_space<vmem>>, vector<128x128xbf16>
    %cst_14 = arith.constant dense<0.000000e+00> : vector<8x128xf32>
    %19 = tpu.matmul %17, %18, %cst_14 {dimension_numbers = #tpu.dot_dimension_numbers<[1], [0], [0], [1], [0, 0, 1, 1], [], []>} : vector<8x128xbf16>, vector<128x128xbf16>, vector<8x128xf32> -> vector<8x128xf32>
    %c0_15 = arith.constant 0 : index
    %c0_16 = arith.constant 0 : index
    %20 = vector.load %arg7[%c0_15, %c0_16] : memref<1x128xf32, #tpu.memory_space<vmem>>, vector<1x128xf32>
    %21 = vector.broadcast %20 : vector<1x128xf32> to vector<8x128xf32>
    %22 = arith.addf %19, %21 : vector<8x128xf32>
    %c0_17 = arith.constant 0 : index
    %c0_18 = arith.constant 0 : index
    %23 = vector.load %arg8[%c0_17, %c0_18] : memref<8x128xf32, #tpu.memory_space<vmem>>, vector<8x128xf32>
    tpu.vector_store %arg8[%c0_17, %c0_18], %22 {strides = array<i32>} : memref<8x128xf32, #tpu.memory_space<vmem>>, vector<8x128xf32>,
    return
  }
  func.func @transform_0(%arg0: i32) -> (i32, i32) {
    %c0_i32 = arith.constant 0 : i32
    %c0_i32_0 = arith.constant 0 : i32
    return %arg0, %c0_i32 : i32, i32
  }
  func.func @transform_1(%arg0: i32) -> (i32, i32) {
    %c0_i32 = arith.constant 0 : i32
    %c0_i32_0 = arith.constant 0 : i32
    %c0_i32_1 = arith.constant 0 : i32
    return %c0_i32, %c0_i32_0 : i32, i32
  }
  func.func @transform_2(%arg0: i32) -> (i32, i32) {
    %c0_i32 = arith.constant 0 : i32
    %c0_i32_0 = arith.constant 0 : i32
    %c0_i32_1 = arith.constant 0 : i32
    return %c0_i32, %c0_i32_0 : i32, i32
  }
  func.func @transform_3(%arg0: i32) -> (i32, i32) {
    %c0_i32 = arith.constant 0 : i32
    %c0_i32_0 = arith.constant 0 : i32
    %c0_i32_1 = arith.constant 0 : i32
    return %c0_i32, %c0_i32_0 : i32, i32
  }
  func.func @transform_4(%arg0: i32) -> (i32, i32) {
    %c0_i32 = arith.constant 0 : i32
    %c0_i32_0 = arith.constant 0 : i32
    %c0_i32_1 = arith.constant 0 : i32
    return %c0_i32, %c0_i32_0 : i32, i32
  }
  func.func @transform_5(%arg0: i32) -> (i32, i32) {
    %c0_i32 = arith.constant 0 : i32
    %c0_i32_0 = arith.constant 0 : i32
    %c0_i32_1 = arith.constant 0 : i32
    return %c0_i32, %c0_i32_0 : i32, i32
  }
  func.func @transform_6(%arg0: i32) -> (i32, i32) {
    %c0_i32 = arith.constant 0 : i32
    %c0_i32_0 = arith.constant 0 : i32
    %c0_i32_1 = arith.constant 0 : i32
    return %c0_i32, %c0_i32_0 : i32, i32
  }
  func.func @transform_7(%arg0: i32) -> (i32, i32) {
    %c0_i32 = arith.constant 0 : i32
    %c0_i32_0 = arith.constant 0 : i32
    return %arg0, %c0_i32 : i32, i32
  }
}

</mosaic_0001>

<llo_original>
// kernel: tpu_custom_call.1
$region0: #{tpu_custom_call.1}
  #allocation0 [shape = 'u32[]', space=smem, size = 0x4, offset = 0x4, fixed_abs, tag = 'smem constant byte address 0x4 - core index']
  #allocation1 [shape = 'u32[144,128]{1,0:T(1,128)}', space=vmem, size = 0x12000, scoped, tag = 'internal scratch']
  %s0 = inlined_call_operand.hbm [shape: f32[8,128], index: 0, kind: input, shape index: {}]
  %s1 = inlined_call_operand.hbm [shape: bf16[128,128], index: 1, kind: input, shape index: {}]
  %s2 = inlined_call_operand.vmem [shape: bf16[1,128], index: 2, kind: input, shape index: {}]
  %s3 = inlined_call_operand.hbm [shape: bf16[128,128], index: 3, kind: input, shape index: {}]
  %s4 = inlined_call_operand.vmem [shape: bf16[1,128], index: 4, kind: input, shape index: {}]
  %s5 = inlined_call_operand.hbm [shape: bf16[128,128], index: 5, kind: input, shape index: {}]
  %s6 = inlined_call_operand.vmem [shape: f32[1,128], index: 6, kind: input, shape index: {}]
  %s7 = inlined_call_operand.hbm [shape: f32[8,128], index: 7, kind: output, shape index: {}]
  %s8 = sld [smem:[#allocation0]]
  $region54: #{tpu_custom_call.1} parent=0
    _
  %s10 = ssub.s32 1, %s8
  %s11 = scalar_select 0, %s10, %s8
  $region1: #{tpu_custom_call.1} parent=0
    #allocation2 [shape = 'u8[4096]{0}', space=vmem, size = 0x1000, scoped, tag = 'input window, operand 0, single buffered']
    #allocation3 [shape = 's32[1]{0}', space=sflag, size = 0x4, scoped, tag = 'scoped memory for tpu_custom_call.1']
    #allocation4 [shape = 's32[1]{0}', space=sflag, size = 0x4, scoped, tag = 'scoped memory for tpu_custom_call.1']
    #allocation5 [shape = 'u8[32768]{0}', space=vmem, size = 0x8000, scoped, tag = 'input window, operand 1, single buffered']
    #allocation6 [shape = 's32[1]{0}', space=sflag, size = 0x4, scoped, tag = 'scoped memory for tpu_custom_call.1']
    #allocation7 [shape = 'u8[32768]{0}', space=vmem, size = 0x8000, scoped, tag = 'input window, operand 3, single buffered']
    #allocation8 [shape = 'u8[32768]{0}', space=vmem, size = 0x8000, scoped, tag = 'input window, operand 5, single buffered']
    #allocation9 [shape = 's32[1]{0}', space=sflag, size = 0x4, scoped, tag = 'scoped memory for tpu_custom_call.1']
    #allocation10 [shape = 'u8[4096]{0}', space=vmem, size = 0x1000, scoped, tag = 'output window, operand 0, single buffered']
    %12 = vsyncpa [#allocation3], 0
    %13 = vsyncpa [#allocation6], 0
    %14 = vsyncpa [#allocation9], 0
    %15 = vsyncpa [#allocation4], 0
    // Predicated region
    $region2: #{tpu_custom_call.1} parent=1 // pred_check
      _
    $region3: #{tpu_custom_call.1} parent=1 // pred_check_branch
      %17 = sbr.rel (0) target = $region5
    $region4: #{tpu_custom_call.1} parent=1 // pred_region
      %s19 = ssub.s32 128, 128
      %20 = vsyncadd [#allocation3], %s19
      %s22 = sshll.u32 [#allocation2], 4
      %s23 = int_to_ptr.vmem [resolvable:$true] %s22
      %25 = dma.hbm_to_vmem [thread:$0]  %s0, 128, %s23, [#allocation3]
    $region5: #{tpu_custom_call.1} parent=1 // pred_fallthru
      _
    // Predicated region
    $region6: #{tpu_custom_call.1} parent=1 // pred_check
      _
    $region7: #{tpu_custom_call.1} parent=1 // pred_check_branch
      %27 = sbr.rel (0) target = $region9
    $region8: #{tpu_custom_call.1} parent=1 // pred_region
      %s29 = ssub.s32 1024, 1024
      %30 = vsyncadd [#allocation6], %s29
      %s31 = sshll.u32 [#allocation5], 4
      %s32 = int_to_ptr.vmem [resolvable:$true] %s31
      %37 = dma.hbm_to_vmem [thread:$0]  %s1, 1024, %s32, [#allocation6], 64, 64, 4
    $region9: #{tpu_custom_call.1} parent=1 // pred_fallthru
      _
    // Predicated region
    $region10: #{tpu_custom_call.1} parent=1 // pred_check
      _
    $region11: #{tpu_custom_call.1} parent=1 // pred_check_branch
      %39 = sbr.rel (0) target = $region13
    $region12: #{tpu_custom_call.1} parent=1 // pred_region
      _
    $region13: #{tpu_custom_call.1} parent=1 // pred_fallthru
      _
    // Predicated region
    $region14: #{tpu_custom_call.1} parent=1 // pred_check
      _
    $region15: #{tpu_custom_call.1} parent=1 // pred_check_branch
      %41 = sbr.rel (0) target = $region17
    $region16: #{tpu_custom_call.1} parent=1 // pred_region
      %s43 = ssub.s32 1024, 1024
      %44 = vsyncadd [#allocation6], %s43
      %s45 = sshll.u32 [#allocation7], 4
      %s46 = int_to_ptr.vmem [resolvable:$true] %s45
      %51 = dma.hbm_to_vmem [thread:$0]  %s3, 1024, %s46, [#allocation6], 64, 64, 4
    $region17: #{tpu_custom_call.1} parent=1 // pred_fallthru
      _
    // Predicated region
    $region18: #{tpu_custom_call.1} parent=1 // pred_check
      _
    $region19: #{tpu_custom_call.1} parent=1 // pred_check_branch
      %53 = sbr.rel (0) target = $region21
    $region20: #{tpu_custom_call.1} parent=1 // pred_region
      _
    $region21: #{tpu_custom_call.1} parent=1 // pred_fallthru
      _
    // Predicated region
    $region22: #{tpu_custom_call.1} parent=1 // pred_check
      _
    $region23: #{tpu_custom_call.1} parent=1 // pred_check_branch
      %55 = sbr.rel (0) target = $region25
    $region24: #{tpu_custom_call.1} parent=1 // pred_region
      %s57 = ssub.s32 1024, 1024
      %58 = vsyncadd [#allocation9], %s57
      %s59 = sshll.u32 [#allocation8], 4
      %s60 = int_to_ptr.vmem [resolvable:$true] %s59
      %65 = dma.hbm_to_vmem [thread:$0]  %s5, 1024, %s60, [#allocation9], 64, 64, 4
    $region25: #{tpu_custom_call.1} parent=1 // pred_fallthru
      _
    // Predicated region
    $region26: #{tpu_custom_call.1} parent=1 // pred_check
      _
    $region27: #{tpu_custom_call.1} parent=1 // pred_check_branch
      %67 = sbr.rel (0) target = $region29
    $region28: #{tpu_custom_call.1} parent=1 // pred_region
      _
    $region29: #{tpu_custom_call.1} parent=1 // pred_fallthru
      _
    // Predicated region
    $region30: #{tpu_custom_call.1} parent=1 // pred_check
      _
    $region31: #{tpu_custom_call.1} parent=1 // pred_check_branch
      %69 = sbr.rel (0) target = $region33
    $region32: #{tpu_custom_call.1} parent=1 // pred_region
      %70 = dma.done [#allocation3], 128
    $region33: #{tpu_custom_call.1} parent=1 // pred_fallthru
      _
    // Predicated region
    $region34: #{tpu_custom_call.1} parent=1 // pred_check
      _
    $region35: #{tpu_custom_call.1} parent=1 // pred_check_branch
      %72 = sbr.rel (0) target = $region37
    $region36: #{tpu_custom_call.1} parent=1 // pred_region
      %73 = dma.done [#allocation6], 1024
    $region37: #{tpu_custom_call.1} parent=1 // pred_fallthru
      _
    // Predicated region
    $region38: #{tpu_custom_call.1} parent=1 // pred_check
      _
    $region39: #{tpu_custom_call.1} parent=1 // pred_check_branch
      %75 = sbr.rel (0) target = $region41
    $region40: #{tpu_custom_call.1} parent=1 // pred_region
      %76 = dma.done [#allocation6], 1024
    $region41: #{tpu_custom_call.1} parent=1 // pred_fallthru
      _
    // Predicated region
    $region42: #{tpu_custom_call.1} parent=1 // pred_check
      _
    $region43: #{tpu_custom_call.1} parent=1 // pred_check_branch
      %78 = sbr.rel (0) target = $region45
    $region44: #{tpu_custom_call.1} parent=1 // pred_region
      %79 = dma.done [#allocation9], 1024
    $region45: #{tpu_custom_call.1} parent=1 // pred_fallthru
      _
    %v81 = vld [vmem:[#allocation2] sm:$0xff]
    %v82 = vpack.c.bf16 %v81, %v81
    %v83 = vld [vmem:[#allocation5] sm:$0xf]
    %v84 = vld [vmem:[#allocation5 + $0x4] sm:$0xf]
    %v85 = vld [vmem:[#allocation5 + $0x8] sm:$0xf]
    %v86 = vld [vmem:[#allocation5 + $0xc] sm:$0xf]
    %v87 = vld [vmem:[#allocation5 + $0x10] sm:$0xf]
    %v88 = vld [vmem:[#allocation5 + $0x14] sm:$0xf]
    %v89 = vld [vmem:[#allocation5 + $0x18] sm:$0xf]
    %v90 = vld [vmem:[#allocation5 + $0x1c] sm:$0xf]
    %v91 = vld [vmem:[#allocation5 + $0x20] sm:$0xf]
    %v92 = vld [vmem:[#allocation5 + $0x24] sm:$0xf]
    %v93 = vld [vmem:[#allocation5 + $0x28] sm:$0xf]
    %v94 = vld [vmem:[#allocation5 + $0x2c] sm:$0xf]
    %v95 = vld [vmem:[#allocation5 + $0x30] sm:$0xf]
    %v96 = vld [vmem:[#allocation5 + $0x34] sm:$0xf]
    %v97 = vld [vmem:[#allocation5 + $0x38] sm:$0xf]
    %v98 = vld [vmem:[#allocation5 + $0x3c] sm:$0xf]
    %v115 = vunpack.c.l.b16 %v83
    %v116 = vunpack.c.l.b16 %v84
    %v117 = vunpack.c.l.b16 %v85
    %v118 = vunpack.c.l.b16 %v86
    %v119 = vunpack.c.l.b16 %v87
    %v120 = vunpack.c.l.b16 %v88
    %v121 = vunpack.c.l.b16 %v89
    %v122 = vunpack.c.l.b16 %v90
    %v123 = vunpack.c.l.b16 %v91
    %v124 = vunpack.c.l.b16 %v92
    %v125 = vunpack.c.l.b16 %v93
    %v126 = vunpack.c.l.b16 %v94
    %v127 = vunpack.c.l.b16 %v95
    %v128 = vunpack.c.l.b16 %v96
    %v129 = vunpack.c.l.b16 %v97
    %v130 = vunpack.c.l.b16 %v98
    %v131 = vpack.c.b16 %v116, %v115
    %v132 = vpack.c.b16 %v118, %v117
    %v133 = vpack.c.b16 %v120, %v119
    %v134 = vpack.c.b16 %v122, %v121
    %v135 = vpack.c.b16 %v124, %v123
    %v136 = vpack.c.b16 %v126, %v125
    %v137 = vpack.c.b16 %v128, %v127
    %v138 = vpack.c.b16 %v130, %v129
    %147 = vmatprep.subr.bf16.mxu0 0
    %148 = vmatpush1.bf16.msra.mxu0 %v131
    %149 = vmatprep.subr.bf16.mxu0 0
    %150 = vmatpush1.bf16.msra.mxu0 %v132
    %151 = vmatprep.subr.bf16.mxu0 0
    %152 = vmatpush1.bf16.msra.mxu0 %v133
    %153 = vmatprep.subr.bf16.mxu0 0
    %154 = vmatpush1.bf16.msra.mxu0 %v134
    %155 = vmatprep.subr.bf16.mxu0 0
    %156 = vmatpush1.bf16.msra.mxu0 %v135
    %157 = vmatprep.subr.bf16.mxu0 0
    %158 = vmatpush1.bf16.msra.mxu0 %v136
    %159 = vmatprep.subr.bf16.mxu0 0
    %160 = vmatpush1.bf16.msra.mxu0 %v137
    %161 = vmatprep.subr.bf16.mxu0 0
    %162 = vmatpush1.bf16.msra.mxu0 %v138
    %163 = vmatprep.subr.bf16.mxu0 0
    %164 = vmatpush1.bf16.msra.mxu0 0
    %165 = vmatprep.subr.bf16.mxu0 0
    %166 = vmatpush1.bf16.msra.mxu0 0
    %167 = vmatprep.subr.bf16.mxu0 0
    %168 = vmatpush1.bf16.msra.mxu0 0
    %169 = vmatprep.subr.bf16.mxu0 0
    %170 = vmatpush1.bf16.msra.mxu0 0
    %171 = vmatprep.subr.bf16.mxu0 0
    %172 = vmatpush1.bf16.msra.mxu0 0
    %173 = vmatprep.subr.bf16.mxu0 0
    %174 = vmatpush1.bf16.msra.mxu0 0
    %175 = vmatprep.subr.bf16.mxu0 0
    %176 = vmatpush1.bf16.msra.mxu0 0
    %177 = vmatprep.subr.bf16.mxu0 0
    %178 = vmatpush1.bf16.msra.mxu0 0
    %179 = vmatprep.mubr.bf16.mxu0 0
    %180 = vmatmul.mubr.bf16.gmra.mrb[0].mxu0 %v82
    %v181 = vpop.f32.mrb[0].mxu0
    %v182 = vadd.f32 0.0, %v181
    %v183 = vpop.f32.mrb[0].mxu0
    %v184 = vpop.f32.mrb[0].mxu0
    %v185 = vpop.f32.mrb[0].mxu0
    %186 = vdwg.mxu0
    %v187 = vpack.c.bf16 %v182, %v182
    %v188 = vld [vmem:[%s2] sm:$0x1]
    %v190 = vpack.i.b16 %v188, %v188
    %v192 = vlaneseq
    %v193 = vshrl.u32 %v192, 7
    %v194 = vsub.s32 0, %v193
    %v195 = vrot.slane %v190, %v194
    %v196 = vadd.bf16 %v187, %v195
    %v197 = vmax.bf16 %v196, 0
    %v198 = vld [vmem:[#allocation7] sm:$0xf]
    %v199 = vld [vmem:[#allocation7 + $0x4] sm:$0xf]
    %v200 = vld [vmem:[#allocation7 + $0x8] sm:$0xf]
    %v201 = vld [vmem:[#allocation7 + $0xc] sm:$0xf]
    %v202 = vld [vmem:[#allocation7 + $0x10] sm:$0xf]
    %v203 = vld [vmem:[#allocation7 + $0x14] sm:$0xf]
    %v204 = vld [vmem:[#allocation7 + $0x18] sm:$0xf]
    %v205 = vld [vmem:[#allocation7 + $0x1c] sm:$0xf]
    %v206 = vld [vmem:[#allocation7 + $0x20] sm:$0xf]
    %v207 = vld [vmem:[#allocation7 + $0x24] sm:$0xf]
    %v208 = vld [vmem:[#allocation7 + $0x28] sm:$0xf]
    %v209 = vld [vmem:[#allocation7 + $0x2c] sm:$0xf]
    %v210 = vld [vmem:[#allocation7 + $0x30] sm:$0xf]
    %v211 = vld [vmem:[#allocation7 + $0x34] sm:$0xf]
    %v212 = vld [vmem:[#allocation7 + $0x38] sm:$0xf]
    %v213 = vld [vmem:[#allocation7 + $0x3c] sm:$0xf]
    %v230 = vunpack.c.l.b16 %v198
    %v231 = vunpack.c.l.b16 %v199
    %v232 = vunpack.c.l.b16 %v200
    %v233 = vunpack.c.l.b16 %v201
    %v234 = vunpack.c.l.b16 %v202
    %v235 = vunpack.c.l.b16 %v203
    %v236 = vunpack.c.l.b16 %v204
    %v237 = vunpack.c.l.b16 %v205
    %v238 = vunpack.c.l.b16 %v206
    %v239 = vunpack.c.l.b16 %v207
    %v240 = vunpack.c.l.b16 %v208
    %v241 = vunpack.c.l.b16 %v209
    %v242 = vunpack.c.l.b16 %v210
    %v243 = vunpack.c.l.b16 %v211
    %v244 = vunpack.c.l.b16 %v212
    %v245 = vunpack.c.l.b16 %v213
    %v246 = vpack.c.b16 %v231, %v230
    %v247 = vpack.c.b16 %v233, %v232
    %v248 = vpack.c.b16 %v235, %v234
    %v249 = vpack.c.b16 %v237, %v236
    %v250 = vpack.c.b16 %v239, %v238
    %v251 = vpack.c.b16 %v241, %v240
    %v252 = vpack.c.b16 %v243, %v242
    %v253 = vpack.c.b16 %v245, %v244
    %262 = vmatprep.subr.bf16.mxu0 0
    %263 = vmatpush1.bf16.msra.mxu0 %v246
    %264 = vmatprep.subr.bf16.mxu0 0
    %265 = vmatpush1.bf16.msra.mxu0 %v247
    %266 = vmatprep.subr.bf16.mxu0 0
    %267 = vmatpush1.bf16.msra.mxu0 %v248
    %268 = vmatprep.subr.bf16.mxu0 0
    %269 = vmatpush1.bf16.msra.mxu0 %v249
    %270 = vmatprep.subr.bf16.mxu0 0
    %271 = vmatpush1.bf16.msra.mxu0 %v250
    %272 = vmatprep.subr.bf16.mxu0 0
    %273 = vmatpush1.bf16.msra.mxu0 %v251
    %274 = vmatprep.subr.bf16.mxu0 0
    %275 = vmatpush1.bf16.msra.mxu0 %v252
    %276 = vmatprep.subr.bf16.mxu0 0
    %277 = vmatpush1.bf16.msra.mxu0 %v253
    %278 = vmatprep.subr.bf16.mxu0 0
    %279 = vmatpush1.bf16.msra.mxu0 0
    %280 = vmatprep.subr.bf16.mxu0 0
    %281 = vmatpush1.bf16.msra.mxu0 0
    %282 = vmatprep.subr.bf16.mxu0 0
    %283 = vmatpush1.bf16.msra.mxu0 0
    %284 = vmatprep.subr.bf16.mxu0 0
    %285 = vmatpush1.bf16.msra.mxu0 0
    %286 = vmatprep.subr.bf16.mxu0 0
    %287 = vmatpush1.bf16.msra.mxu0 0
    %288 = vmatprep.subr.bf16.mxu0 0
    %289 = vmatpush1.bf16.msra.mxu0 0
    %290 = vmatprep.subr.bf16.mxu0 0
    %291 = vmatpush1.bf16.msra.mxu0 0
    %292 = vmatprep.subr.bf16.mxu0 0
    %293 = vmatpush1.bf16.msra.mxu0 0
    %294 = vmatprep.mubr.bf16.mxu0 0
    %295 = vmatmul.mubr.bf16.gmra.mrb[0].mxu0 %v197
    %v296 = vpop.f32.mrb[0].mxu0
    %v297 = vadd.f32 0.0, %v296
    %v298 = vpop.f32.mrb[0].mxu0
    %v299 = vpop.f32.mrb[0].mxu0
    %v300 = vpop.f32.mrb[0].mxu0
    %301 = vdwg.mxu0
    %v302 = vpack.c.bf16 %v297, %v297
    %v303 = vld [vmem:[%s4] sm:$0x1]
    %v305 = vpack.i.b16 %v303, %v303
    %v307 = vlaneseq
    %v308 = vshrl.u32 %v307, 7
    %v309 = vsub.s32 0, %v308
    %v310 = vrot.slane %v305, %v309
    %v311 = vadd.bf16 %v302, %v310
    %v312 = vmax.bf16 %v311, 0
    %v313 = vld [vmem:[#allocation8] sm:$0xf]
    %v314 = vld [vmem:[#allocation8 + $0x4] sm:$0xf]
    %v315 = vld [vmem:[#allocation8 + $0x8] sm:$0xf]
    %v316 = vld [vmem:[#allocation8 + $0xc] sm:$0xf]
    %v317 = vld [vmem:[#allocation8 + $0x10] sm:$0xf]
    %v318 = vld [vmem:[#allocation8 + $0x14] sm:$0xf]
    %v319 = vld [vmem:[#allocation8 + $0x18] sm:$0xf]
    %v320 = vld [vmem:[#allocation8 + $0x1c] sm:$0xf]
    %v321 = vld [vmem:[#allocation8 + $0x20] sm:$0xf]
    %v322 = vld [vmem:[#allocation8 + $0x24] sm:$0xf]
    %v323 = vld [vmem:[#allocation8 + $0x28] sm:$0xf]
    %v324 = vld [vmem:[#allocation8 + $0x2c] sm:$0xf]
    %v325 = vld [vmem:[#allocation8 + $0x30] sm:$0xf]
    %v326 = vld [vmem:[#allocation8 + $0x34] sm:$0xf]
    %v327 = vld [vmem:[#allocation8 + $0x38] sm:$0xf]
    %v328 = vld [vmem:[#allocation8 + $0x3c] sm:$0xf]
    %v329 = vld [vmem:[%s6] sm:$0x1]
    %v331 = vlaneseq
    %v332 = vshrl.u32 %v331, 7
    %v333 = vsub.s32 0, %v332
    %v334 = vrot.slane %v329, %v333
    %v352 = vunpack.c.l.b16 %v313
    %v353 = vunpack.c.l.b16 %v314
    %v354 = vunpack.c.l.b16 %v315
    %v355 = vunpack.c.l.b16 %v316
    %v356 = vunpack.c.l.b16 %v317
    %v357 = vunpack.c.l.b16 %v318
    %v358 = vunpack.c.l.b16 %v319
    %v359 = vunpack.c.l.b16 %v320
    %v360 = vunpack.c.l.b16 %v321
    %v361 = vunpack.c.l.b16 %v322
    %v362 = vunpack.c.l.b16 %v323
    %v363 = vunpack.c.l.b16 %v324
    %v364 = vunpack.c.l.b16 %v325
    %v365 = vunpack.c.l.b16 %v326
    %v366 = vunpack.c.l.b16 %v327
    %v367 = vunpack.c.l.b16 %v328
    %v368 = vpack.c.b16 %v353, %v352
    %v369 = vpack.c.b16 %v355, %v354
    %v370 = vpack.c.b16 %v357, %v356
    %v371 = vpack.c.b16 %v359, %v358
    %v372 = vpack.c.b16 %v361, %v360
    %v373 = vpack.c.b16 %v363, %v362
    %v374 = vpack.c.b16 %v365, %v364
    %v375 = vpack.c.b16 %v367, %v366
    %384 = vmatprep.subr.bf16.mxu0 0
    %385 = vmatpush1.bf16.msra.mxu0 %v368
    %386 = vmatprep.subr.bf16.mxu0 0
    %387 = vmatpush1.bf16.msra.mxu0 %v369
    %388 = vmatprep.subr.bf16.mxu0 0
    %389 = vmatpush1.bf16.msra.mxu0 %v370
    %390 = vmatprep.subr.bf16.mxu0 0
    %391 = vmatpush1.bf16.msra.mxu0 %v371
    %392 = vmatprep.subr.bf16.mxu0 0
    %393 = vmatpush1.bf16.msra.mxu0 %v372
    %394 = vmatprep.subr.bf16.mxu0 0
    %395 = vmatpush1.bf16.msra.mxu0 %v373
    %396 = vmatprep.subr.bf16.mxu0 0
    %397 = vmatpush1.bf16.msra.mxu0 %v374
    %398 = vmatprep.subr.bf16.mxu0 0
    %399 = vmatpush1.bf16.msra.mxu0 %v375
    %400 = vmatprep.subr.bf16.mxu0 0
    %401 = vmatpush1.bf16.msra.mxu0 0
    %402 = vmatprep.subr.bf16.mxu0 0
    %403 = vmatpush1.bf16.msra.mxu0 0
    %404 = vmatprep.subr.bf16.mxu0 0
    %405 = vmatpush1.bf16.msra.mxu0 0
    %406 = vmatprep.subr.bf16.mxu0 0
    %407 = vmatpush1.bf16.msra.mxu0 0
    %408 = vmatprep.subr.bf16.mxu0 0
    %409 = vmatpush1.bf16.msra.mxu0 0
    %410 = vmatprep.subr.bf16.mxu0 0
    %411 = vmatpush1.bf16.msra.mxu0 0
    %412 = vmatprep.subr.bf16.mxu0 0
    %413 = vmatpush1.bf16.msra.mxu0 0
    %414 = vmatprep.subr.bf16.mxu0 0
    %415 = vmatpush1.bf16.msra.mxu0 0
    %416 = vmatprep.mubr.bf16.mxu0 0
    %417 = vmatmul.mubr.bf16.gmra.mrb[0].mxu0 %v312
    %v418 = vpop.f32.mrb[0].mxu0
    %v419 = vadd.f32 %v334, %v418
    %v420 = vpop.f32.mrb[0].mxu0
    %v421 = vpop.f32.mrb[0].mxu0
    %v422 = vpop.f32.mrb[0].mxu0
    %423 = vdwg.mxu0
    %424 = vst [vmem:[#allocation10] sm:$0xff] %v419
    // Predicated region
    $region46: #{tpu_custom_call.1} parent=1 // pred_check
      _
    $region47: #{tpu_custom_call.1} parent=1 // pred_check_branch
      %426 = sbr.rel (0) target = $region49
    $region48: #{tpu_custom_call.1} parent=1 // pred_region
      %s428 = ssub.s32 128, 128
      %429 = vsyncadd [#allocation4], %s428
      %s431 = sshll.u32 [#allocation10], 4
      %s432 = int_to_ptr.vmem [resolvable:$true] %s431
      %434 = dma.vmem_to_hbm [thread:$0]  %s432, 128, %s7, [#allocation4]
    $region49: #{tpu_custom_call.1} parent=1 // pred_fallthru
      _
    // Predicated region
    $region50: #{tpu_custom_call.1} parent=1 // pred_check
      _
    $region51: #{tpu_custom_call.1} parent=1 // pred_check_branch
      %436 = sbr.rel (0) target = $region53
    $region52: #{tpu_custom_call.1} parent=1 // pred_region
      %437 = dma.done [#allocation4], 128
    $region53: #{tpu_custom_call.1} parent=1 // pred_fallthru
      _
    %438 = vsyncpa [#allocation3], 1
    %439 = vsyncpa [#allocation6], 1
    %440 = vsyncpa [#allocation9], 1
    %441 = vsyncpa [#allocation4], 1

</llo_original>
